<compile_context>
chip_gen: v6e
topology: v6e:2x2x1
jax: 0.10.0
libtpu: 0.0.40
codegen_flags: <defaults>
</compile_context>

<pallas_src>
import jax
import jax.numpy as jnp
from jax import lax
from jax.experimental import pallas as pl
from jax.experimental.pallas import tpu as pltpu


_SQRT_HALF = 0.7071067811865476


def _gelu_exact(x):
    # Matches torch.nn.GELU() default (exact, erf-based); computed in f32.
    return 0.5 * x * (1.0 + lax.erf(x * _SQRT_HALF))


def mlp_kernel(x_ref, w1_ref, b1_ref, w2_ref, b2_ref, o_ref, acc_ref):
    # Grid: (row tiles, hidden chunks). Hidden axis is the reduction of the
    # second matmul -> accumulate into f32 scratch, finalize on last chunk.
    k = pl.program_id(1)

    # First matmul + bias + exact GELU, all in f32 (v5e has no bf16 VPU/EUP).
    h = jnp.dot(x_ref[...], w1_ref[...], preferred_element_type=jnp.float32)
    h = h + b1_ref[...].astype(jnp.float32)
    h = _gelu_exact(h)

    # Second matmul over this hidden chunk; cast only right before the MXU.
    partial = jnp.dot(h.astype(w2_ref.dtype), w2_ref[...],
                      preferred_element_type=jnp.float32)

    @pl.when(k == 0)
    def _init():
        acc_ref[...] = partial

    @pl.when(k > 0)
    def _accum():
        acc_ref[...] += partial

    @pl.when(k == pl.num_programs(1) - 1)
    def _finalize():
        o_ref[...] = (acc_ref[...] +
                      b2_ref[...].astype(jnp.float32)).astype(o_ref.dtype)


def _round_up(v, m):
    return ((v + m - 1) // m) * m


def _select_tiles(M, dim_p, hidden, in_b, w_b, out_b, tm_req, tk_req, budget):
    """Pick (row tile, hidden chunk) so the working set fits the VMEM budget."""
    tm = min(_round_up(tm_req, 16), _round_up(M, 16))
    tk = min(_round_up(tk_req, 128), _round_up(hidden, 128))

    def footprint(tm_, tk_):
        return (2 * tm_ * dim_p * in_b          # x tiles (double-buffered)
                + 2 * tm_ * dim_p * out_b       # output tiles
                + tm_ * dim_p * 4               # f32 accumulator scratch
                + 2 * dim_p * tk_ * w_b         # w1 chunks
                + 2 * tk_ * dim_p * w_b         # w2 chunks
                + 2 * 8 * tk_ * 4 + 8 * dim_p * 4   # biases (sublane-padded)
                + 2 * tm_ * tk_ * 4)            # GELU intermediate headroom

    while footprint(tm, tk) > budget and tk > 128:
        tk -= 128
    while footprint(tm, tk) > budget and tm > 16:
        tm = max(16, _round_up(tm // 2, 16))
    # TODO(synk): for extremely large model dims a third (output-column) grid
    # axis would be needed; typical MLP dims fit with the shrinking above.
    return tm, tk, footprint(tm, tk)


def mlp_pallas(x, w1, b1, w2, b2, *, tm=256, tk=512, compute_dtype=None):
    """Fused MLP: y = GELU(x @ w1 + b1) @ w2 + b2.

    x: (..., dim); w1: (dim, hidden); b1: (hidden,); w2: (hidden, dim);
    b2: (dim,). Weights are stored as (in, out), i.e. torch Linear weight.T.
    compute_dtype: optional matmul-input dtype (e.g. jnp.bfloat16) with f32
    accumulation; default keeps the input dtype (exact f32 parity).
    """
    orig_shape = x.shape
    dim = orig_shape[-1]
    hidden = w1.shape[1]
    out_dtype = x.dtype
    M = 1
    for s in orig_shape[:-1]:
        M *= s

    x2d = x.reshape(M, dim)
    if compute_dtype is not None:
        x2d = x2d.astype(compute_dtype)
        w1 = w1.astype(compute_dtype)
        w2 = w2.astype(compute_dtype)

    in_bytes = jnp.dtype(x2d.dtype).itemsize
    w_bytes = jnp.dtype(w1.dtype).itemsize
    out_bytes = jnp.dtype(out_dtype).itemsize

    # Lane-dense padding: output/input feature dim to a multiple of 128.
    dim_p = _round_up(dim, 128)

    # Tile selection under a conservative VMEM budget (v7x has 64 MiB total).
    budget = 48 * 1024 * 1024
    tm_eff, tk_eff, footprint = _select_tiles(
        M, dim_p, hidden, in_bytes, w_bytes, out_bytes, tm, tk, budget)

    M_pad = _round_up(M, tm_eff)
    hidden_p = _round_up(hidden, tk_eff)   # tk_eff is a multiple of 128

    x_p = jnp.pad(x2d, ((0, M_pad - M), (0, dim_p - dim)))
    w1_p = jnp.pad(w1, ((0, dim_p - dim), (0, hidden_p - hidden)))
    b1_p = jnp.pad(b1.reshape(1, hidden), ((0, 0), (0, hidden_p - hidden)))
    w2_p = jnp.pad(w2, ((0, hidden_p - hidden), (0, dim_p - dim)))
    b2_p = jnp.pad(b2.reshape(1, dim), ((0, 0), (0, dim_p - dim)))

    grid = (M_pad // tm_eff, hidden_p // tk_eff)

    vmem_limit = int(min(max(int(1.5 * footprint), 32 * 1024 * 1024),
                         64 * 1024 * 1024))

    cost = pl.CostEstimate(
        flops=4 * M * dim * hidden,                 # two matmuls
        transcendentals=M * hidden,                 # erf per hidden activation
        bytes_accessed=(x2d.size * in_bytes + w1.size * w_bytes
                        + w2.size * w_bytes + (b1.size + b2.size) * 4
                        + M * dim * out_bytes),
    )

    out = pl.pallas_call(
        mlp_kernel,
        out_shape=jax.ShapeDtypeStruct((M_pad, dim_p), out_dtype),
        grid_spec=pltpu.PrefetchScalarGridSpec(
            num_scalar_prefetch=0,
            grid=grid,
            in_specs=[
                pl.BlockSpec((tm_eff, dim_p), lambda i, k: (i, 0)),   # x rows
                pl.BlockSpec((dim_p, tk_eff), lambda i, k: (0, k)),   # w1 chunk
                pl.BlockSpec((1, tk_eff), lambda i, k: (0, k)),       # b1 chunk
                pl.BlockSpec((tk_eff, dim_p), lambda i, k: (k, 0)),   # w2 chunk
                pl.BlockSpec((1, dim_p), lambda i, k: (0, 0)),        # b2
            ],
            out_specs=pl.BlockSpec((tm_eff, dim_p), lambda i, k: (i, 0)),
            scratch_shapes=[pltpu.VMEM((tm_eff, dim_p), jnp.float32)],
        ),
        compiler_params=pltpu.CompilerParams(
            dimension_semantics=("parallel", "arbitrary"),
            vmem_limit_bytes=vmem_limit,
        ),
        cost_estimate=cost,
    )(x_p, w1_p, b1_p, w2_p, b2_p)

    return out[:M, :dim].reshape(orig_shape)


def mlp_reference(x, w1, b1, w2, b2):
    h = jnp.dot(x, w1) + b1
    h = 0.5 * h * (1.0 + lax.erf(h * _SQRT_HALF))
    return jnp.dot(h, w2) + b2


if __name__ == "__main__":
    # Small shapes consistent with the module: dim=32, hidden = 4*dim = 128.
    B, S, dim = 2, 8, 32
    hidden = 4 * dim

    key = jax.random.PRNGKey(0)
    kx, k1, kb1, k2, kb2 = jax.random.split(key, 5)

    x = jax.random.normal(kx, (B, S, dim), dtype=jnp.float32)
    # Deterministic init (uniform, roughly matching nn.Linear's scale).
    w1 = jax.random.uniform(k1, (dim, hidden), dtype=jnp.float32,
                            minval=-1.0, maxval=1.0) / jnp.sqrt(dim * 1.0)
    b1 = jax.random.uniform(kb1, (hidden,), dtype=jnp.float32,
                            minval=-1.0, maxval=1.0) / jnp.sqrt(dim * 1.0)
    w2 = jax.random.uniform(k2, (hidden, dim), dtype=jnp.float32,
                            minval=-1.0, maxval=1.0) / jnp.sqrt(hidden * 1.0)
    b2 = jax.random.uniform(kb2, (dim,), dtype=jnp.float32,
                            minval=-1.0, maxval=1.0) / jnp.sqrt(hidden * 1.0)

    out = mlp_pallas(x, w1, b1, w2, b2)
    out = jax.block_until_ready(out)

    ref = mlp_reference(x, w1, b1, w2, b2)
    assert out.shape == (B, S, dim)
    assert jnp.allclose(out, ref, atol=1e-4, rtol=1e-4), "mismatch vs reference"

    print("KERNEL_OK")
</pallas_src>

<mosaic_0001>
module attributes {stable_mosaic.version = 11 : i64} {
  func.func @mlp_kernel(%arg0: i32, %arg1: i32, %arg2: memref<16x128xf32, #tpu.memory_space<vmem>>, %arg3: memref<128x128xf32, #tpu.memory_space<vmem>>, %arg4: memref<1x128xf32, #tpu.memory_space<vmem>>, %arg5: memref<128x128xf32, #tpu.memory_space<vmem>>, %arg6: memref<1x128xf32, #tpu.memory_space<vmem>>, %arg7: memref<16x128xf32, #tpu.memory_space<vmem>>, %arg8: memref<16x128xf32, #tpu.memory_space<vmem>>) attributes {dimension_semantics = [#tpu.dimension_semantics<parallel>, #tpu.dimension_semantics<arbitrary>], iteration_bounds = array<i64: 1, 1>, scalar_prefetch = 0 : i64, scratch_operands = 1 : i64, tpu.core_type = #tpu.core_type<tc>, window_params = [{transform_indices = @transform_0, window_bounds = array<i64: 16, 128>}, {transform_indices = @transform_1, window_bounds = array<i64: 128, 128>}, {transform_indices = @transform_2, window_bounds = array<i64: 1, 128>}, {transform_indices = @transform_3, window_bounds = array<i64: 128, 128>}, {pipeline_mode = #tpu.pipeline_mode<synchronous>, transform_indices = @transform_4, window_bounds = array<i64: 1, 128>}, {transform_indices = @transform_5, window_bounds = array<i64: 16, 128>}]} {
    %c0 = arith.constant 0 : index
    %c0_0 = arith.constant 0 : index
    %0 = vector.load %arg2[%c0, %c0_0] : memref<16x128xf32, #tpu.memory_space<vmem>>, vector<16x128xf32>
    %c0_1 = arith.constant 0 : index
    %c0_2 = arith.constant 0 : index
    %1 = vector.load %arg3[%c0_1, %c0_2] : memref<128x128xf32, #tpu.memory_space<vmem>>, vector<128x128xf32>
    %cst = arith.constant dense<0.000000e+00> : vector<16x128xf32>
    %2 = tpu.matmul %0, %1, %cst {dimension_numbers = #tpu.dot_dimension_numbers<[1], [0], [0], [1], [0, 0, 1, 1], [], []>} : vector<16x128xf32>, vector<128x128xf32>, vector<16x128xf32> -> vector<16x128xf32>
    %c0_3 = arith.constant 0 : index
    %c0_4 = arith.constant 0 : index
    %3 = vector.load %arg4[%c0_3, %c0_4] : memref<1x128xf32, #tpu.memory_space<vmem>>, vector<1x128xf32>
    %4 = vector.broadcast %3 : vector<1x128xf32> to vector<16x128xf32>
    %5 = arith.addf %2, %4 : vector<16x128xf32>
    %cst_5 = arith.constant 5.000000e-01 : f32
    %6 = vector.broadcast %cst_5 : f32 to vector<16x128xf32>
    %7 = arith.mulf %6, %5 : vector<16x128xf32>
    %cst_6 = arith.constant 0.707106769 : f32
    %8 = vector.broadcast %cst_6 : f32 to vector<16x128xf32>
    %9 = arith.mulf %5, %8 : vector<16x128xf32>
    %10 = math.erf %9 : vector<16x128xf32>
    %cst_7 = arith.constant 1.000000e+00 : f32
    %11 = vector.broadcast %cst_7 : f32 to vector<16x128xf32>
    %12 = arith.addf %11, %10 : vector<16x128xf32>
    %13 = arith.mulf %7, %12 : vector<16x128xf32>
    %c0_8 = arith.constant 0 : index
    %c0_9 = arith.constant 0 : index
    %14 = vector.load %arg5[%c0_8, %c0_9] : memref<128x128xf32, #tpu.memory_space<vmem>>, vector<128x128xf32>
    %cst_10 = arith.constant dense<0.000000e+00> : vector<16x128xf32>
    %15 = tpu.matmul %13, %14, %cst_10 {dimension_numbers = #tpu.dot_dimension_numbers<[1], [0], [0], [1], [0, 0, 1, 1], [], []>} : vector<16x128xf32>, vector<128x128xf32>, vector<16x128xf32> -> vector<16x128xf32>
    %c0_i32 = arith.constant 0 : i32
    %16 = arith.cmpi eq, %arg1, %c0_i32 : i32
    %17 = arith.extui %16 : i1 to i32
    %c0_i32_11 = arith.constant 0 : i32
    %18 = arith.cmpi ne, %17, %c0_i32_11 : i32
    scf.if %18 {
      %c0_16 = arith.constant 0 : index
      %c0_17 = arith.constant 0 : index
      %25 = vector.load %arg8[%c0_16, %c0_17] : memref<16x128xf32, #tpu.memory_space<vmem>>, vector<16x128xf32>
      tpu.vector_store %arg8[%c0_16, %c0_17], %15 {strides = array<i32>} : memref<16x128xf32, #tpu.memory_space<vmem>>, vector<16x128xf32>,
    } else {
    }
    %c0_i32_12 = arith.constant 0 : i32
    %19 = arith.cmpi sgt, %arg1, %c0_i32_12 : i32
    %20 = arith.extui %19 : i1 to i32
    %c0_i32_13 = arith.constant 0 : i32
    %21 = arith.cmpi ne, %20, %c0_i32_13 : i32
    scf.if %21 {
      %c0_16 = arith.constant 0 : index
      %c0_17 = arith.constant 0 : index
      %25 = vector.load %arg8[%c0_16, %c0_17] : memref<16x128xf32, #tpu.memory_space<vmem>>, vector<16x128xf32>
      %26 = arith.addf %25, %15 : vector<16x128xf32>
      %c0_18 = arith.constant 0 : index
      %c0_19 = arith.constant 0 : index
      %27 = vector.load %arg8[%c0_18, %c0_19] : memref<16x128xf32, #tpu.memory_space<vmem>>, vector<16x128xf32>
      tpu.vector_store %arg8[%c0_18, %c0_19], %26 {strides = array<i32>} : memref<16x128xf32, #tpu.memory_space<vmem>>, vector<16x128xf32>,
    } else {
    }
    %c0_i32_14 = arith.constant 0 : i32
    %22 = arith.cmpi eq, %arg1, %c0_i32_14 : i32
    %23 = arith.extui %22 : i1 to i32
    %c0_i32_15 = arith.constant 0 : i32
    %24 = arith.cmpi ne, %23, %c0_i32_15 : i32
    scf.if %24 {
      %c0_16 = arith.constant 0 : index
      %c0_17 = arith.constant 0 : index
      %25 = vector.load %arg8[%c0_16, %c0_17] : memref<16x128xf32, #tpu.memory_space<vmem>>, vector<16x128xf32>
      %c0_18 = arith.constant 0 : index
      %c0_19 = arith.constant 0 : index
      %26 = vector.load %arg6[%c0_18, %c0_19] : memref<1x128xf32, #tpu.memory_space<vmem>>, vector<1x128xf32>
      %27 = vector.broadcast %26 : vector<1x128xf32> to vector<16x128xf32>
      %28 = arith.addf %25, %27 : vector<16x128xf32>
      %c0_20 = arith.constant 0 : index
      %c0_21 = arith.constant 0 : index
      %29 = vector.load %arg7[%c0_20, %c0_21] : memref<16x128xf32, #tpu.memory_space<vmem>>, vector<16x128xf32>
      tpu.vector_store %arg7[%c0_20, %c0_21], %28 {strides = array<i32>} : memref<16x128xf32, #tpu.memory_space<vmem>>, vector<16x128xf32>,
    } else {
    }
    return
  }
  func.func @transform_0(%arg0: i32, %arg1: i32) -> (i32, i32) {
    %c0_i32 = arith.constant 0 : i32
    %c0_i32_0 = arith.constant 0 : i32
    return %arg0, %c0_i32 : i32, i32
  }
  func.func @transform_1(%arg0: i32, %arg1: i32) -> (i32, i32) {
    %c0_i32 = arith.constant 0 : i32
    %c0_i32_0 = arith.constant 0 : i32
    return %c0_i32, %arg1 : i32, i32
  }
  func.func @transform_2(%arg0: i32, %arg1: i32) -> (i32, i32) {
    %c0_i32 = arith.constant 0 : i32
    %c0_i32_0 = arith.constant 0 : i32
    return %c0_i32, %arg1 : i32, i32
  }
  func.func @transform_3(%arg0: i32, %arg1: i32) -> (i32, i32) {
    %c0_i32 = arith.constant 0 : i32
    %c0_i32_0 = arith.constant 0 : i32
    return %arg1, %c0_i32 : i32, i32
  }
  func.func @transform_4(%arg0: i32, %arg1: i32) -> (i32, i32) {
    %c0_i32 = arith.constant 0 : i32
    %c0_i32_0 = arith.constant 0 : i32
    %c0_i32_1 = arith.constant 0 : i32
    return %c0_i32, %c0_i32_0 : i32, i32
  }
  func.func @transform_5(%arg0: i32, %arg1: i32) -> (i32, i32) {
    %c0_i32 = arith.constant 0 : i32
    %c0_i32_0 = arith.constant 0 : i32
    return %arg0, %c0_i32 : i32, i32
  }
}

</mosaic_0001>

<llo_original>
// kernel: tpu_custom_call.1
$region0: #{tpu_custom_call.1}
  #allocation0 [shape = 'u32[]', space=smem, size = 0x4, offset = 0x4, fixed_abs, tag = 'smem constant byte address 0x4 - core index']
  #allocation1 [shape = 'u32[144,128]{1,0:T(1,128)}', space=vmem, size = 0x12000, scoped, tag = 'internal scratch']
  #allocation2 [shape = 'f32[16,128]{1,0:T(8,128)}', space=vmem, size = 0x2000, scoped, tag = 'scratch operand']
  %s0 = inlined_call_operand.hbm [shape: f32[16,128], index: 0, kind: input, shape index: {}]
  %s1 = inlined_call_operand.hbm [shape: f32[128,128], index: 1, kind: input, shape index: {}]
  %s2 = inlined_call_operand.vmem [shape: f32[1,128], index: 2, kind: input, shape index: {}]
  %s3 = inlined_call_operand.hbm [shape: f32[128,128], index: 3, kind: input, shape index: {}]
  %s4 = inlined_call_operand.vmem [shape: f32[1,128], index: 4, kind: input, shape index: {}]
  %s5 = inlined_call_operand.hbm [shape: f32[16,128], index: 5, kind: output, shape index: {}]
  %s6 = sld [smem:[#allocation0]]
  $region54: #{tpu_custom_call.1} parent=0
    _
  %s8 = ssub.s32 1, %s6
  %s9 = scalar_select 0, %s8, %s6
  $region1: #{tpu_custom_call.1} parent=0
    #allocation3 [shape = 'u8[8192]{0}', space=vmem, size = 0x2000, scoped, tag = 'input window, operand 0, single buffered']
    #allocation4 [shape = 's32[1]{0}', space=sflag, size = 0x4, scoped, tag = 'scoped memory for tpu_custom_call.1']
    #allocation5 [shape = 's32[1]{0}', space=sflag, size = 0x4, scoped, tag = 'scoped memory for tpu_custom_call.1']
    #allocation6 [shape = 'u8[65536]{0}', space=vmem, size = 0x10000, scoped, tag = 'input window, operand 1, single buffered']
    #allocation7 [shape = 's32[1]{0}', space=sflag, size = 0x4, scoped, tag = 'scoped memory for tpu_custom_call.1']
    #allocation8 [shape = 'u8[65536]{0}', space=vmem, size = 0x10000, scoped, tag = 'input window, operand 3, single buffered']
    #allocation9 [shape = 'u8[8192]{0}', space=vmem, size = 0x2000, scoped, tag = 'output window, operand 0, single buffered']
    %10 = vsyncpa [#allocation4], 0
    %11 = vsyncpa [#allocation7], 0
    %12 = vsyncpa [#allocation5], 0
    // Predicated region
    $region2: #{tpu_custom_call.1} parent=1 // pred_check
      _
    $region3: #{tpu_custom_call.1} parent=1 // pred_check_branch
      %14 = sbr.rel (0) target = $region5
    $region4: #{tpu_custom_call.1} parent=1 // pred_region
      %s16 = ssub.s32 256, 256
      %17 = vsyncadd [#allocation4], %s16
      %s18 = sshll.u32 [#allocation3], 4
      %s19 = int_to_ptr.vmem [resolvable:$true] %s18
      %24 = dma.hbm_to_vmem [thread:$0]  %s0, 256, %s19, [#allocation4], 128, 128, 8
    $region5: #{tpu_custom_call.1} parent=1 // pred_fallthru
      _
    // Predicated region
    $region6: #{tpu_custom_call.1} parent=1 // pred_check
      _
    $region7: #{tpu_custom_call.1} parent=1 // pred_check_branch
      %26 = sbr.rel (0) target = $region9
    $region8: #{tpu_custom_call.1} parent=1 // pred_region
      %s28 = ssub.s32 2048, 2048
      %29 = vsyncadd [#allocation7], %s28
      %s30 = sshll.u32 [#allocation6], 4
      %s31 = int_to_ptr.vmem [resolvable:$true] %s30
      %36 = dma.hbm_to_vmem [thread:$0]  %s1, 2048, %s31, [#allocation7], 128, 128, 8
    $region9: #{tpu_custom_call.1} parent=1 // pred_fallthru
      _
    // Predicated region
    $region10: #{tpu_custom_call.1} parent=1 // pred_check
      _
    $region11: #{tpu_custom_call.1} parent=1 // pred_check_branch
      %38 = sbr.rel (0) target = $region13
    $region12: #{tpu_custom_call.1} parent=1 // pred_region
      _
    $region13: #{tpu_custom_call.1} parent=1 // pred_fallthru
      _
    // Predicated region
    $region14: #{tpu_custom_call.1} parent=1 // pred_check
      _
    $region15: #{tpu_custom_call.1} parent=1 // pred_check_branch
      %40 = sbr.rel (0) target = $region17
    $region16: #{tpu_custom_call.1} parent=1 // pred_region
      %s42 = ssub.s32 2048, 2048
      %43 = vsyncadd [#allocation7], %s42
      %s44 = sshll.u32 [#allocation8], 4
      %s45 = int_to_ptr.vmem [resolvable:$true] %s44
      %50 = dma.hbm_to_vmem [thread:$0]  %s3, 2048, %s45, [#allocation7], 128, 128, 8
    $region17: #{tpu_custom_call.1} parent=1 // pred_fallthru
      _
    // Predicated region
    $region18: #{tpu_custom_call.1} parent=1 // pred_check
      _
    $region19: #{tpu_custom_call.1} parent=1 // pred_check_branch
      %52 = sbr.rel (0) target = $region21
    $region20: #{tpu_custom_call.1} parent=1 // pred_region
      _
    $region21: #{tpu_custom_call.1} parent=1 // pred_fallthru
      _
    // Predicated region
    $region22: #{tpu_custom_call.1} parent=1 // pred_check
      _
    $region23: #{tpu_custom_call.1} parent=1 // pred_check_branch
      %54 = sbr.rel (0) target = $region25
    $region24: #{tpu_custom_call.1} parent=1 // pred_region
      %55 = dma.done [#allocation4], 256
    $region25: #{tpu_custom_call.1} parent=1 // pred_fallthru
      _
    // Predicated region
    $region26: #{tpu_custom_call.1} parent=1 // pred_check
      _
    $region27: #{tpu_custom_call.1} parent=1 // pred_check_branch
      %57 = sbr.rel (0) target = $region29
    $region28: #{tpu_custom_call.1} parent=1 // pred_region
      %58 = dma.done [#allocation7], 2048
    $region29: #{tpu_custom_call.1} parent=1 // pred_fallthru
      _
    // Predicated region
    $region30: #{tpu_custom_call.1} parent=1 // pred_check
      _
    $region31: #{tpu_custom_call.1} parent=1 // pred_check_branch
      %60 = sbr.rel (0) target = $region33
    $region32: #{tpu_custom_call.1} parent=1 // pred_region
      %61 = dma.done [#allocation7], 2048
    $region33: #{tpu_custom_call.1} parent=1 // pred_fallthru
      _
    %v62 = vld [vmem:[#allocation3] sm:$0xff]
    %v63 = vld [vmem:[#allocation3 + $0x8] sm:$0xff]
    %v64 = vld [vmem:[#allocation6] sm:$0xff]
    %v65 = vld [vmem:[#allocation6 + $0x8] sm:$0xff]
    %v66 = vld [vmem:[#allocation6 + $0x10] sm:$0xff]
    %v67 = vld [vmem:[#allocation6 + $0x18] sm:$0xff]
    %v68 = vld [vmem:[#allocation6 + $0x20] sm:$0xff]
    %v69 = vld [vmem:[#allocation6 + $0x28] sm:$0xff]
    %v70 = vld [vmem:[#allocation6 + $0x30] sm:$0xff]
    %v71 = vld [vmem:[#allocation6 + $0x38] sm:$0xff]
    %v72 = vld [vmem:[#allocation6 + $0x40] sm:$0xff]
    %v73 = vld [vmem:[#allocation6 + $0x48] sm:$0xff]
    %v74 = vld [vmem:[#allocation6 + $0x50] sm:$0xff]
    %v75 = vld [vmem:[#allocation6 + $0x58] sm:$0xff]
    %v76 = vld [vmem:[#allocation6 + $0x60] sm:$0xff]
    %v77 = vld [vmem:[#allocation6 + $0x68] sm:$0xff]
    %v78 = vld [vmem:[#allocation6 + $0x70] sm:$0xff]
    %v79 = vld [vmem:[#allocation6 + $0x78] sm:$0xff]
    %v80 = vld [vmem:[%s2] sm:$0x1]
    %v82 = vlaneseq
    %v83 = vshrl.u32 %v82, 7
    %v84 = vsub.s32 0, %v83
    %v85 = vrot.slane %v80, %v84
    %87 = vmatprep.subr.mxu0 0.0
    %88 = vmatpush1.msra.mxu0 %v79
    %89 = vmatprep.subr.mxu0 0.0
    %90 = vmatpush1.msra.mxu0 %v78
    %91 = vmatprep.subr.mxu0 0.0
    %92 = vmatpush1.msra.mxu0 %v77
    %93 = vmatprep.subr.mxu0 0.0
    %94 = vmatpush1.msra.mxu0 %v76
    %95 = vmatprep.subr.mxu0 0.0
    %96 = vmatpush1.msra.mxu0 %v75
    %97 = vmatprep.subr.mxu0 0.0
    %98 = vmatpush1.msra.mxu0 %v74
    %99 = vmatprep.subr.mxu0 0.0
    %100 = vmatpush1.msra.mxu0 %v73
    %101 = vmatprep.subr.mxu0 0.0
    %102 = vmatpush1.msra.mxu0 %v72
    %103 = vmatprep.subr.mxu0 0.0
    %104 = vmatpush1.msra.mxu0 %v71
    %105 = vmatprep.subr.mxu0 0.0
    %106 = vmatpush1.msra.mxu0 %v70
    %107 = vmatprep.subr.mxu0 0.0
    %108 = vmatpush1.msra.mxu0 %v69
    %109 = vmatprep.subr.mxu0 0.0
    %110 = vmatpush1.msra.mxu0 %v68
    %111 = vmatprep.subr.mxu0 0.0
    %112 = vmatpush1.msra.mxu0 %v67
    %113 = vmatprep.subr.mxu0 0.0
    %114 = vmatpush1.msra.mxu0 %v66
    %115 = vmatprep.subr.mxu0 0.0
    %116 = vmatpush1.msra.mxu0 %v65
    %117 = vmatprep.subr.mxu0 0.0
    %118 = vmatpush1.msra.mxu0 %v64
    %119 = vmatprep.subr.mxu0 0.0
    %120 = vmatpush2.msra.mxu0 0.0
    %121 = vmatprep.subr.mxu0 0.0
    %122 = vmatpush2.msra.mxu0 0.0
    %123 = vmatprep.subr.mxu0 0.0
    %124 = vmatpush2.msra.mxu0 0.0
    %125 = vmatprep.subr.mxu0 0.0
    %126 = vmatpush2.msra.mxu0 0.0
    %127 = vmatprep.subr.mxu0 0.0
    %128 = vmatpush2.msra.mxu0 0.0
    %129 = vmatprep.subr.mxu0 0.0
    %130 = vmatpush2.msra.mxu0 0.0
    %131 = vmatprep.subr.mxu0 0.0
    %132 = vmatpush2.msra.mxu0 0.0
    %133 = vmatprep.subr.mxu0 0.0
    %134 = vmatpush2.msra.mxu0 0.0
    %135 = vmatprep.subr.mxu0 0.0
    %136 = vmatpush2.msra.mxu0 0.0
    %137 = vmatprep.subr.mxu0 0.0
    %138 = vmatpush2.msra.mxu0 0.0
    %139 = vmatprep.subr.mxu0 0.0
    %140 = vmatpush2.msra.mxu0 0.0
    %141 = vmatprep.subr.mxu0 0.0
    %142 = vmatpush2.msra.mxu0 0.0
    %143 = vmatprep.subr.mxu0 0.0
    %144 = vmatpush2.msra.mxu0 0.0
    %145 = vmatprep.subr.mxu0 0.0
    %146 = vmatpush2.msra.mxu0 0.0
    %147 = vmatprep.subr.mxu0 0.0
    %148 = vmatpush2.msra.mxu0 0.0
    %149 = vmatprep.subr.mxu0 0.0
    %150 = vmatpush2.msra.mxu0 0.0
    %151 = vmatprep.mubr.f32.mxu0 0.0
    %152 = vmatmul.mubr.f32.gmra.mxu0 %v62
    %v153 = vpop.f32.mrf.mxu0
    %v154 = vadd.f32 %v85, %v153
    %v155 = vpop.f32.mrf.mxu0
    %156 = vmatprep.mubr.f32.mxu0 0.0
    %157 = vmatmul.mubr.f32.gmra.mxu0 %v63
    %v158 = vpop.f32.mrf.mxu0
    %v159 = vadd.f32 %v85, %v158
    %v160 = vpop.f32.mrf.mxu0
    %161 = vdwg.mxu0
    %v162 = vmul.f32 %v154, 0.5
    %v163 = vmul.f32 %v159, 0.5
    %v164 = vmul.f32 %v154, 0.70710677
    %v165 = vmul.f32 %v159, 0.70710677
    %v166 = verf.f32.pop %v164
    %v167 = verf.f32.pop %v165
    %v168 = vadd.f32 %v166, 1.0
    %v169 = vadd.f32 %v167, 1.0
    %v170 = vmul.f32 %v162, %v168
    %v171 = vmul.f32 %v163, %v169
    %v172 = vld [vmem:[#allocation8] sm:$0xff]
    %v173 = vld [vmem:[#allocation8 + $0x8] sm:$0xff]
    %v174 = vld [vmem:[#allocation8 + $0x10] sm:$0xff]
    %v175 = vld [vmem:[#allocation8 + $0x18] sm:$0xff]
    %v176 = vld [vmem:[#allocation8 + $0x20] sm:$0xff]
    %v177 = vld [vmem:[#allocation8 + $0x28] sm:$0xff]
    %v178 = vld [vmem:[#allocation8 + $0x30] sm:$0xff]
    %v179 = vld [vmem:[#allocation8 + $0x38] sm:$0xff]
    %v180 = vld [vmem:[#allocation8 + $0x40] sm:$0xff]
    %v181 = vld [vmem:[#allocation8 + $0x48] sm:$0xff]
    %v182 = vld [vmem:[#allocation8 + $0x50] sm:$0xff]
    %v183 = vld [vmem:[#allocation8 + $0x58] sm:$0xff]
    %v184 = vld [vmem:[#allocation8 + $0x60] sm:$0xff]
    %v185 = vld [vmem:[#allocation8 + $0x68] sm:$0xff]
    %v186 = vld [vmem:[#allocation8 + $0x70] sm:$0xff]
    %v187 = vld [vmem:[#allocation8 + $0x78] sm:$0xff]
    %188 = vmatprep.subr.mxu0 0.0
    %189 = vmatpush1.msra.mxu0 %v187
    %190 = vmatprep.subr.mxu0 0.0
    %191 = vmatpush1.msra.mxu0 %v186
    %192 = vmatprep.subr.mxu0 0.0
    %193 = vmatpush1.msra.mxu0 %v185
    %194 = vmatprep.subr.mxu0 0.0
    %195 = vmatpush1.msra.mxu0 %v184
    %196 = vmatprep.subr.mxu0 0.0
    %197 = vmatpush1.msra.mxu0 %v183
    %198 = vmatprep.subr.mxu0 0.0
    %199 = vmatpush1.msra.mxu0 %v182
    %200 = vmatprep.subr.mxu0 0.0
    %201 = vmatpush1.msra.mxu0 %v181
    %202 = vmatprep.subr.mxu0 0.0
    %203 = vmatpush1.msra.mxu0 %v180
    %204 = vmatprep.subr.mxu0 0.0
    %205 = vmatpush1.msra.mxu0 %v179
    %206 = vmatprep.subr.mxu0 0.0
    %207 = vmatpush1.msra.mxu0 %v178
    %208 = vmatprep.subr.mxu0 0.0
    %209 = vmatpush1.msra.mxu0 %v177
    %210 = vmatprep.subr.mxu0 0.0
    %211 = vmatpush1.msra.mxu0 %v176
    %212 = vmatprep.subr.mxu0 0.0
    %213 = vmatpush1.msra.mxu0 %v175
    %214 = vmatprep.subr.mxu0 0.0
    %215 = vmatpush1.msra.mxu0 %v174
    %216 = vmatprep.subr.mxu0 0.0
    %217 = vmatpush1.msra.mxu0 %v173
    %218 = vmatprep.subr.mxu0 0.0
    %219 = vmatpush1.msra.mxu0 %v172
    %220 = vmatprep.subr.mxu0 0.0
    %221 = vmatpush2.msra.mxu0 0.0
    %222 = vmatprep.subr.mxu0 0.0
    %223 = vmatpush2.msra.mxu0 0.0
    %224 = vmatprep.subr.mxu0 0.0
    %225 = vmatpush2.msra.mxu0 0.0
    %226 = vmatprep.subr.mxu0 0.0
    %227 = vmatpush2.msra.mxu0 0.0
    %228 = vmatprep.subr.mxu0 0.0
    %229 = vmatpush2.msra.mxu0 0.0
    %230 = vmatprep.subr.mxu0 0.0
    %231 = vmatpush2.msra.mxu0 0.0
    %232 = vmatprep.subr.mxu0 0.0
    %233 = vmatpush2.msra.mxu0 0.0
    %234 = vmatprep.subr.mxu0 0.0
    %235 = vmatpush2.msra.mxu0 0.0
    %236 = vmatprep.subr.mxu0 0.0
    %237 = vmatpush2.msra.mxu0 0.0
    %238 = vmatprep.subr.mxu0 0.0
    %239 = vmatpush2.msra.mxu0 0.0
    %240 = vmatprep.subr.mxu0 0.0
    %241 = vmatpush2.msra.mxu0 0.0
    %242 = vmatprep.subr.mxu0 0.0
    %243 = vmatpush2.msra.mxu0 0.0
    %244 = vmatprep.subr.mxu0 0.0
    %245 = vmatpush2.msra.mxu0 0.0
    %246 = vmatprep.subr.mxu0 0.0
    %247 = vmatpush2.msra.mxu0 0.0
    %248 = vmatprep.subr.mxu0 0.0
    %249 = vmatpush2.msra.mxu0 0.0
    %250 = vmatprep.subr.mxu0 0.0
    %251 = vmatpush2.msra.mxu0 0.0
    %252 = vmatprep.mubr.f32.mxu0 0.0
    %253 = vmatmul.mubr.f32.gmra.mxu0 %v170
    %v254 = vpop.f32.mrf.mxu0
    %v255 = vadd.f32 0.0, %v254
    %v256 = vpop.f32.mrf.mxu0
    %257 = vmatprep.mubr.f32.mxu0 0.0
    %258 = vmatmul.mubr.f32.gmra.mxu0 %v171
    %v259 = vpop.f32.mrf.mxu0
    %v260 = vadd.f32 0.0, %v259
    %v261 = vpop.f32.mrf.mxu0
    %262 = vdwg.mxu0
    %p263 = scmp.eq.s32.totalorder 0, 0
    // Predicated region
    $region34: #{tpu_custom_call.1} parent=1 // pred_check
      %p264 = pneg %p263
    $region35: #{tpu_custom_call.1} parent=1 // pred_check_branch
      %266 = sbr.rel (%p264) target = $region37
    $region36: #{tpu_custom_call.1} parent=1 // pred_region
      %267 = vst [vmem:[#allocation2] sm:$0xff] %v255
      %268 = vst [vmem:[#allocation2 + $0x8] sm:$0xff] %v260
    $region37: #{tpu_custom_call.1} parent=1 // pred_fallthru
      _
    %p269 = scmp.gt.s32.totalorder 0, 0
    // Predicated region
    $region38: #{tpu_custom_call.1} parent=1 // pred_check
      %p270 = pneg %p269
    $region39: #{tpu_custom_call.1} parent=1 // pred_check_branch
      %272 = sbr.rel (%p270) target = $region41
    $region40: #{tpu_custom_call.1} parent=1 // pred_region
      %v273 = vld [vmem:[#allocation2] sm:$0xff]
      %v274 = vld [vmem:[#allocation2 + $0x8] sm:$0xff]
      %v275 = vadd.f32 %v273, %v255
      %v276 = vadd.f32 %v274, %v260
      %277 = vst [vmem:[#allocation2] sm:$0xff] %v275
      %278 = vst [vmem:[#allocation2 + $0x8] sm:$0xff] %v276
    $region41: #{tpu_custom_call.1} parent=1 // pred_fallthru
      _
    // Predicated region
    $region42: #{tpu_custom_call.1} parent=1 // pred_check
      %p279 = pneg %p263
    $region43: #{tpu_custom_call.1} parent=1 // pred_check_branch
      %281 = sbr.rel (%p279) target = $region45
    $region44: #{tpu_custom_call.1} parent=1 // pred_region
      %v282 = vld [vmem:[#allocation2] sm:$0xff]
      %v283 = vld [vmem:[#allocation2 + $0x8] sm:$0xff]
      %v284 = vld [vmem:[%s4] sm:$0x1]
      %v286 = vlaneseq
      %v287 = vshrl.u32 %v286, 7
      %v288 = vsub.s32 0, %v287
      %v289 = vrot.slane %v284, %v288
      %v291 = vadd.f32 %v282, %v289
      %v292 = vadd.f32 %v283, %v289
      %293 = vst [vmem:[#allocation9] sm:$0xff] %v291
      %294 = vst [vmem:[#allocation9 + $0x8] sm:$0xff] %v292
    $region45: #{tpu_custom_call.1} parent=1 // pred_fallthru
      _
    // Predicated region
    $region46: #{tpu_custom_call.1} parent=1 // pred_check
      _
    $region47: #{tpu_custom_call.1} parent=1 // pred_check_branch
      %296 = sbr.rel (0) target = $region49
    $region48: #{tpu_custom_call.1} parent=1 // pred_region
      %s298 = ssub.s32 256, 256
      %299 = vsyncadd [#allocation5], %s298
      %s300 = sshll.u32 [#allocation9], 4
      %s301 = int_to_ptr.vmem [resolvable:$true] %s300
      %306 = dma.vmem_to_hbm [thread:$0]  %s301, 256, %s5, [#allocation5], 128, 128, 8
    $region49: #{tpu_custom_call.1} parent=1 // pred_fallthru
      _
    // Predicated region
    $region50: #{tpu_custom_call.1} parent=1 // pred_check
      _
    $region51: #{tpu_custom_call.1} parent=1 // pred_check_branch
      %308 = sbr.rel (0) target = $region53
    $region52: #{tpu_custom_call.1} parent=1 // pred_region
      %309 = dma.done [#allocation5], 256
    $region53: #{tpu_custom_call.1} parent=1 // pred_fallthru
      _
    %310 = vsyncpa [#allocation4], 1
    %311 = vsyncpa [#allocation7], 1
    %312 = vsyncpa [#allocation5], 1

</llo_original>
